<compile_context>
chip_gen: v6e
topology: v6e:2x2x1
jax: 0.10.0
libtpu: 0.0.40
codegen_flags: <defaults>
</compile_context>

<pallas_src>
import math

import jax
import jax.numpy as jnp
from jax.experimental import pallas as pl
from jax.experimental.pallas import tpu as pltpu

_LANES = 128


def _cdiv(a, b):
    return -(-a // b)


def _round_up(a, b):
    return _cdiv(a, b) * b


def _device_budget():
    """Returns (vmem_limit_bytes, max_tile_bytes_per_input, n_tensorcores)."""
    # Conservative fallback (matches v7x: 64 MiB physical VMEM).
    vmem_phys = 64 * 1024 * 1024
    try:
        info = pltpu.get_tpu_info()
        vmem_phys = int(getattr(info, "vmem_capacity_bytes", vmem_phys))
    except Exception:
        pass
    n_cores = 1
    try:
        kind = (getattr(jax.devices()[0], "device_kind", "") or "").lower()
        if "v7" in kind:          # v7x: 2 TensorCores per chip
            n_cores = 2
    except Exception:
        pass
    if vmem_phys >= 128 * 1024 * 1024:          # v5e / v6e
        return 64 * 1024 * 1024, 8 * 1024 * 1024, n_cores
    # v7x (or unknown): half the VMEM — keep 32 MiB scoped limit, 4 MiB tiles.
    return 32 * 1024 * 1024, 4 * 1024 * 1024, n_cores


# ---------------------------------------------------------------------------
# 1. forward() : identity pass-through kernel (API parity only)
# ---------------------------------------------------------------------------
def _identity_kernel(x_ref, o_ref):
    o_ref[...] = x_ref[...]


def _pick_tile_rows(B, F, itemsize, max_tile_bytes):
    """Largest multiple-of-8 row count that divides B, within the tile budget."""
    byte_cap = max(8, (max_tile_bytes // max(1, F * itemsize)) // 8 * 8)
    cap = min(byte_cap, B)
    for cand in range(cap, 7, -8):
        if B % cand == 0:
            return cand
    return 8  # TODO(synk): pad+mask ragged B instead of tiny-tile fallback


def model_forward(x):
    """Base-class forward stand-in (identity). x: [B, F]. Not on the hot path."""
    B, F = x.shape
    assert B % 8 == 0, "B must be a multiple of 8"  # TODO(synk): mask ragged B
    vmem_limit, max_tile_bytes, _ = _device_budget()
    tile_b = _pick_tile_rows(B, F, jnp.dtype(x.dtype).itemsize, max_tile_bytes)
    # TODO(synk): callers on a hot path should bypass this (identity) or donate
    # the input and use input_output_aliases to drop the extra HBM round-trip.
    return pl.pallas_call(
        _identity_kernel,
        out_shape=jax.ShapeDtypeStruct((B, F), x.dtype),
        grid_spec=pltpu.PrefetchScalarGridSpec(
            num_scalar_prefetch=0,
            grid=(B // tile_b,),
            in_specs=[pl.BlockSpec((tile_b, F), lambda i: (i, 0))],
            out_specs=pl.BlockSpec((tile_b, F), lambda i: (i, 0)),
        ),
        compiler_params=pltpu.CompilerParams(
            dimension_semantics=("parallel",),
            vmem_limit_bytes=vmem_limit),
    )(x)


# ---------------------------------------------------------------------------
# 2. criterion(y_hat, y) : MSE as a lane-dense tiled grid reduction
#    - inputs flattened to (rows, 128) so every vreg / DMA burst is full width
#    - output IS the per-core (8, 128) f32 accumulator (resident across the
#      reduction axis, init/finalized via pl.when) -> lane-dense writeback
#    - leading "parallel" axis = per-TensorCore partials (v7x only)
# ---------------------------------------------------------------------------
def _mse_partial_kernel(yhat_ref, y_ref, o_ref):
    j = pl.program_id(1)  # reduction axis (last)

    @pl.when(j == 0)
    def _():
        o_ref[...] = jnp.zeros_like(o_ref)

    d = yhat_ref[...].astype(jnp.float32) - y_ref[...].astype(jnp.float32)
    d2 = d * d
    tr, lanes = d2.shape
    # Fold (tr, 128) -> (8, 128) with pure vreg-wise VPU adds (no per-step XLU).
    o_ref[0] += jnp.sum(d2.reshape(tr // 8, 8, lanes), axis=0)


def mse_loss(y_hat, y, *, tile_rows=None):
    """Mean-squared-error over all elements, computed on-TPU in Pallas.

    Works for any shape / any size (ragged sizes are zero-padded: padded rows
    contribute 0 to the squared-error sum, the divisor stays the true count).
    """
    assert y_hat.shape == y.shape, "y_hat and y must have the same shape"
    n_true = math.prod(y_hat.shape)
    assert n_true > 0

    vmem_limit, max_tile_bytes, n_par = _device_budget()
    itemsize = min(jnp.dtype(y_hat.dtype).itemsize, jnp.dtype(y.dtype).itemsize)
    align = max(8, 32 // itemsize)          # 8 sublanes (f32), 16 (bf16), ...
    rows = _cdiv(n_true, _LANES)

    if tile_rows is None:
        max_tile_rows = max(
            align, (max_tile_bytes // (_LANES * itemsize)) // align * align)
        grid_total = _cdiv(rows, max_tile_rows)
    else:
        tile_rows = _round_up(int(tile_rows), align)
        grid_total = _cdiv(rows, tile_rows)
    if n_par > 1:
        grid_total = _round_up(grid_total, n_par)   # clean per-core split
    if tile_rows is None:
        tile_rows = _round_up(_cdiv(rows, grid_total), align)
    rows_padded = grid_total * tile_rows
    n_steps = grid_total // n_par

    yh = y_hat.reshape(-1)
    yy = y.reshape(-1)
    pad = rows_padded * _LANES - n_true
    if pad:
        # TODO(synk): an in-kernel row mask would avoid this pad copy for
        # ragged sizes; zero-padding both operands keeps the sum exact.
        yh = jnp.pad(yh, (0, pad))
        yy = jnp.pad(yy, (0, pad))
    yh = yh.reshape(rows_padded, _LANES)
    yy = yy.reshape(rows_padded, _LANES)

    def in_map(c, j):
        return (c * n_steps + j, 0)

    partials = pl.pallas_call(
        _mse_partial_kernel,
        out_shape=jax.ShapeDtypeStruct((n_par, 8, _LANES), jnp.float32),
        grid_spec=pltpu.PrefetchScalarGridSpec(
            num_scalar_prefetch=0,
            grid=(n_par, n_steps),
            in_specs=[
                pl.BlockSpec((tile_rows, _LANES), in_map),
                pl.BlockSpec((tile_rows, _LANES), in_map),
            ],
            out_specs=pl.BlockSpec((1, 8, _LANES), lambda c, j: (c, 0, 0)),
        ),
        compiler_params=pltpu.CompilerParams(
            dimension_semantics=("parallel", "arbitrary"),
            vmem_limit_bytes=vmem_limit),
    )(yh, yy)
    # Tiny final reduce (n_par*8*128 floats) + 1/N in XLA.
    return jnp.sum(partials) * (1.0 / float(n_true))


# ---------------------------------------------------------------------------
# 3. "epoch" helper mirroring _val_epoch.  forward() is the base-class
#    identity, so x feeds the loss directly.  Equal-sized batches mean that
#    the mean of per-batch MSEs equals the MSE over the whole stacked tensor,
#    so the per-batch loop collapses into ONE Pallas launch.
# ---------------------------------------------------------------------------
@jax.jit
def _epoch_mean_loss(xs, ys):
    return mse_loss(xs, ys)


def val_epoch(batches):
    xs = jnp.stack([b[0] for b in batches])
    ys = jnp.stack([b[1] for b in batches])
    return _epoch_mean_loss(xs, ys)  # device scalar; sync once at the caller


if __name__ == "__main__":
    key = jax.random.PRNGKey(0)
    kx, ky = jax.random.split(key)

    # F deliberately NOT a multiple of 128 -> exercises lane-dense flattening.
    B, F = 64, 24
    x = jax.random.normal(kx, (B, F), dtype=jnp.float32)
    y = jax.random.normal(ky, (B, F), dtype=jnp.float32)

    # Base-class forward (identity stand-in) — API parity check only.
    y_hat = model_forward(x)
    jax.block_until_ready(y_hat)
    assert y_hat.shape == x.shape and y_hat.dtype == x.dtype
    assert bool(jnp.all(y_hat == x))

    ref = jnp.mean((x - y) ** 2)
    loss = mse_loss(x, y)
    jax.block_until_ready(loss)
    assert jnp.allclose(loss, ref, rtol=1e-5, atol=1e-6)

    # Forced small tile on a taller input: exercises the multi-step reduction
    # (and the per-core split where available) without padding.
    B3 = 256
    x3 = jax.random.normal(kx, (B3, F), dtype=jnp.float32)
    y3 = jax.random.normal(ky, (B3, F), dtype=jnp.float32)
    ref3 = jnp.mean((x3 - y3) ** 2)
    loss3 = mse_loss(x3, y3, tile_rows=8)
    jax.block_until_ready(loss3)
    assert jnp.allclose(loss3, ref3, rtol=1e-5, atol=1e-6)

    # Awkward / ragged size: exercises zero-pad + true-N normalization.
    B2, F2 = 37, 7
    x2 = jax.random.normal(kx, (B2, F2), dtype=jnp.float32)
    y2 = jax.random.normal(ky, (B2, F2), dtype=jnp.float32)
    ref2 = jnp.mean((x2 - y2) ** 2)
    loss2 = mse_loss(x2, y2)
    jax.block_until_ready(loss2)
    assert jnp.allclose(loss2, ref2, rtol=1e-5, atol=1e-6)

    # bf16 inputs: half the HBM bytes, f32 math in-kernel.
    xb = x.astype(jnp.bfloat16)
    yb = y.astype(jnp.bfloat16)
    refb = jnp.mean((xb.astype(jnp.float32) - yb.astype(jnp.float32)) ** 2)
    lossb = mse_loss(xb, yb)
    jax.block_until_ready(lossb)
    assert jnp.allclose(lossb, refb, rtol=1e-5, atol=1e-6)

    # "Validation epoch" over two synthetic batches: one fused Pallas launch.
    batches = [(x, y), (0.5 * x, y)]
    ep = val_epoch(batches)
    jax.block_until_ready(ep)
    ref_ep = (jnp.mean((x - y) ** 2) + jnp.mean((0.5 * x - y) ** 2)) / 2.0
    assert jnp.allclose(ep, ref_ep, rtol=1e-5, atol=1e-6)

    print("KERNEL_OK")
</pallas_src>

<mosaic_0001>
module attributes {stable_mosaic.version = 11 : i64} {
  func.func @_identity_kernel(%arg0: i32, %arg1: memref<64x24xf32, #tpu.memory_space<vmem>>, %arg2: memref<64x24xf32, #tpu.memory_space<vmem>>) attributes {dimension_semantics = [#tpu.dimension_semantics<parallel>], iteration_bounds = array<i64: 1>, scalar_prefetch = 0 : i64, scratch_operands = 0 : i64, tpu.core_type = #tpu.core_type<tc>, window_params = [{transform_indices = @transform_0, window_bounds = array<i64: 64, 24>}, {transform_indices = @transform_1, window_bounds = array<i64: 64, 24>}]} {
    %c0 = arith.constant 0 : index
    %c0_0 = arith.constant 0 : index
    %0 = vector.load %arg1[%c0, %c0_0] : memref<64x24xf32, #tpu.memory_space<vmem>>, vector<64x24xf32>
    %c0_1 = arith.constant 0 : index
    %c0_2 = arith.constant 0 : index
    %1 = vector.load %arg2[%c0_1, %c0_2] : memref<64x24xf32, #tpu.memory_space<vmem>>, vector<64x24xf32>
    tpu.vector_store %arg2[%c0_1, %c0_2], %0 {strides = array<i32>} : memref<64x24xf32, #tpu.memory_space<vmem>>, vector<64x24xf32>,
    return
  }
  func.func @transform_0(%arg0: i32) -> (i32, i32) {
    %c0_i32 = arith.constant 0 : i32
    %c0_i32_0 = arith.constant 0 : i32
    return %arg0, %c0_i32 : i32, i32
  }
  func.func @transform_1(%arg0: i32) -> (i32, i32) {
    %c0_i32 = arith.constant 0 : i32
    %c0_i32_0 = arith.constant 0 : i32
    return %arg0, %c0_i32 : i32, i32
  }
}

</mosaic_0001>

<llo_original>
// kernel: tpu_custom_call.1
$region0: #{tpu_custom_call.1}
  #allocation0 [shape = 'u32[]', space=smem, size = 0x4, offset = 0x4, fixed_abs, tag = 'smem constant byte address 0x4 - core index']
  #allocation1 [shape = 'u32[144,128]{1,0:T(1,128)}', space=vmem, size = 0x12000, scoped, tag = 'internal scratch']
  %s0 = inlined_call_operand.vmem [shape: f32[64,24], index: 0, kind: input, shape index: {}]
  %s1 = inlined_call_operand.vmem [shape: f32[64,24], index: 1, kind: output, shape index: {}]
  %s2 = sld [smem:[#allocation0]]
  $region14: #{tpu_custom_call.1} parent=0
    _
  %s4 = ssub.s32 1, %s2
  %s5 = scalar_select 0, %s4, %s2
  // Predicated region
  $region2: #{tpu_custom_call.1} parent=0 // pred_check
    _
  $region3: #{tpu_custom_call.1} parent=0 // pred_check_branch
    %7 = sbr.rel (0) target = $region5
  $region4: #{tpu_custom_call.1} parent=0 // pred_region
    _
  $region5: #{tpu_custom_call.1} parent=0 // pred_fallthru
    _
  %v8 = vld [vmem:[%s0] sm:$0xff]
  %v9 = vld [vmem:[%s0 + $0x8] sm:$0xff]
  %v10 = vld [vmem:[%s0 + $0x10] sm:$0xff]
  %v11 = vld [vmem:[%s0 + $0x18] sm:$0xff]
  %v12 = vld [vmem:[%s0 + $0x20] sm:$0xff]
  %v13 = vld [vmem:[%s0 + $0x28] sm:$0xff]
  %v14 = vld [vmem:[%s0 + $0x30] sm:$0xff]
  %v15 = vld [vmem:[%s0 + $0x38] sm:$0xff]
  %vm16 = vcmask 195584
  %17 = vst.msk [vmem:[%s1] sm:$0xff] %vm16, %v8
  %18 = vst.msk [vmem:[%s1 + $0x8] sm:$0xff] %vm16, %v9
  %19 = vst.msk [vmem:[%s1 + $0x10] sm:$0xff] %vm16, %v10
  %20 = vst.msk [vmem:[%s1 + $0x18] sm:$0xff] %vm16, %v11
  %21 = vst.msk [vmem:[%s1 + $0x20] sm:$0xff] %vm16, %v12
  %22 = vst.msk [vmem:[%s1 + $0x28] sm:$0xff] %vm16, %v13
  %23 = vst.msk [vmem:[%s1 + $0x30] sm:$0xff] %vm16, %v14
  %24 = vst.msk [vmem:[%s1 + $0x38] sm:$0xff] %vm16, %v15
  // Predicated region
  $region6: #{tpu_custom_call.1} parent=0 // pred_check
    _
  $region7: #{tpu_custom_call.1} parent=0 // pred_check_branch
    %26 = sbr.rel (0) target = $region9
  $region8: #{tpu_custom_call.1} parent=0 // pred_region
    _
  $region9: #{tpu_custom_call.1} parent=0 // pred_fallthru
    _
  // Predicated region
  $region10: #{tpu_custom_call.1} parent=0 // pred_check
    _
  $region11: #{tpu_custom_call.1} parent=0 // pred_check_branch
    %28 = sbr.rel (0) target = $region13
  $region12: #{tpu_custom_call.1} parent=0 // pred_region
    _
  $region13: #{tpu_custom_call.1} parent=0 // pred_fallthru
    _

</llo_original>
